<compile_context>
chip_gen: v6e
topology: v6e:2x2x1
jax: 0.10.0
libtpu: 0.0.40
codegen_flags: <defaults>
</compile_context>

<pallas_src>
import functools

import jax
import jax.numpy as jnp
from jax.experimental import pallas as pl
from jax.experimental.pallas import tpu as pltpu


def _t5_layernorm_kernel(x_ref, w_ref, o_ref, *, eps: float, weight_is_half: bool):
    # x_ref: (tile_rows, hidden)   w_ref: (1, hidden)   o_ref: (tile_rows, hidden)
    x_f32 = x_ref[...].astype(jnp.float32)
    # variance = mean(x^2) over hidden (last/lane axis), accumulated in f32.
    variance = jnp.mean(x_f32 * x_f32, axis=-1, keepdims=True)
    h = x_f32 * jax.lax.rsqrt(variance + eps)
    w = w_ref[...]
    if weight_is_half:
        # torch: cast hidden_states down to the (half-precision) weight dtype
        # before scaling.
        h = h.astype(w.dtype)
    o_ref[...] = (w * h).astype(o_ref.dtype)


def _round_up(n: int, m: int) -> int:
    return -(-n // m) * m


def _sublane_pack(dtype) -> int:
    # f32 -> 8, bf16/f16 -> 16, int8/fp8 -> 32 rows per full sublane group.
    return max(8, 32 // jnp.dtype(dtype).itemsize)


def _vmem_budget_bytes() -> int:
    # Conservative on every generation: never trust a chip-level number above
    # v7x's 64 MiB per-TensorCore physical VMEM, and keep half for Mosaic
    # scratch / double-buffer slack.
    cap = 64 << 20
    try:
        cap = min(cap, int(pltpu.get_tpu_info().vmem_capacity_bytes))
    except Exception:
        pass
    return cap // 2


_TARGET_TILE_BYTES = 4 << 20   # ~4 MiB input per grid step amortizes step overhead
_MIN_TILE_BYTES = 1 << 20      # don't shrink below ~1 MiB just to add grid steps


def _choose_tiling(rows: int, hidden: int, x_dtype, out_dtype):
    """Pick (tile_rows, vmem_limit_bytes) for a bandwidth-bound streaming norm."""
    pack = _sublane_pack(x_dtype)
    x_b = jnp.dtype(x_dtype).itemsize
    o_b = jnp.dtype(out_dtype).itemsize
    # f32 intermediates live in the body (x_f32 and h before the cast):
    # ~2 f32 tiles for sub-f32 inputs, ~1 extra for f32 inputs.
    interm_b = 4 if x_b >= 4 else 8
    bytes_per_row = hidden * (2 * x_b + 2 * o_b + interm_b)

    budget = _vmem_budget_bytes()
    max_rows_by_vmem = max(pack, budget // max(bytes_per_row, 1))
    target_rows = max(pack, _TARGET_TILE_BYTES // max(hidden * x_b, 1))
    tile_rows = min(max_rows_by_vmem, target_rows)
    tile_rows = max(pack, (tile_rows // pack) * pack)   # full sublane packing

    # Never larger than the (pack-rounded) problem.
    tile_rows = min(tile_rows, _round_up(rows, pack))

    # Prefer >= 4 grid steps (v7x has 2 TensorCores per chip; also keeps the
    # double-buffer pipeline full) as long as tiles stay >= ~1 MiB of input.
    quarter = _round_up(-(-rows // 4), pack)
    if quarter * hidden * x_b >= _MIN_TILE_BYTES:
        tile_rows = min(tile_rows, quarter)

    per_tile_bytes = tile_rows * bytes_per_row
    # Safe on every generation: below v7x's 64 MiB per-core physical VMEM,
    # above v5e's 16 MiB scoped default when needed.
    vmem_limit = min(56 << 20, max(32 << 20, per_tile_bytes + (4 << 20)))
    return int(tile_rows), int(vmem_limit)


def t5_layernorm(x: jax.Array, weight: jax.Array, eps: float = 1e-6,
                 tile_rows: int | None = None) -> jax.Array:
    """T5-style RMS layer norm over the last axis of x (torch-exact semantics)."""
    orig_shape = x.shape
    hidden = orig_shape[-1]
    assert weight.shape == (hidden,)

    weight_is_half = weight.dtype in (jnp.float16, jnp.bfloat16)
    # torch: weight * (x_f32 * rsqrt) -> f32 unless weight is half-precision.
    out_dtype = weight.dtype if weight_is_half else jnp.promote_types(
        jnp.float32, weight.dtype)

    # TODO(synk): for lane-sparse hidden (< 128 or not a multiple of 128), fold
    # rows into the lane axis to avoid masked vst.msk stores; typical T5 hiddens
    # (512-4096) are already lane-dense so this is left as-is.
    x2d = x.reshape(-1, hidden)
    rows = x2d.shape[0]

    auto_tile, vmem_limit = _choose_tiling(rows, hidden, x.dtype, out_dtype)
    if tile_rows is None:
        tile_rows = auto_tile

    # Ragged rows handled by the grid itself: OOB tail-block stores are masked,
    # and the per-row reduction never mixes valid and garbage rows.
    num_tiles = pl.cdiv(rows, tile_rows)
    w2d = weight.reshape(1, hidden)

    out = pl.pallas_call(
        functools.partial(_t5_layernorm_kernel, eps=eps,
                          weight_is_half=weight_is_half),
        out_shape=jax.ShapeDtypeStruct((rows, hidden), out_dtype),
        grid_spec=pltpu.PrefetchScalarGridSpec(
            num_scalar_prefetch=0,
            grid=(num_tiles,),
            in_specs=[
                pl.BlockSpec((tile_rows, hidden), lambda i: (i, 0)),
                # Constant across the grid -> stays resident in VMEM.
                pl.BlockSpec((1, hidden), lambda i: (0, 0)),
            ],
            out_specs=pl.BlockSpec((tile_rows, hidden), lambda i: (i, 0)),
        ),
        compiler_params=pltpu.CompilerParams(
            dimension_semantics=("parallel",),
            vmem_limit_bytes=vmem_limit),
    )(x2d, w2d)

    return out.reshape(orig_shape)


def _ref_t5_layernorm(x, weight, eps):
    var = jnp.mean(x.astype(jnp.float32) ** 2, axis=-1, keepdims=True)
    h = x.astype(jnp.float32) * jax.lax.rsqrt(var + eps)
    if weight.dtype in (jnp.float16, jnp.bfloat16):
        h = h.astype(weight.dtype)
    return weight * h


if __name__ == "__main__":
    key = jax.random.PRNGKey(0)

    # Small shape consistent with the module: (batch, seq, hidden).
    batch, seq, hidden = 2, 8, 32
    x = jax.random.normal(key, (batch, seq, hidden), dtype=jnp.float32)
    # nn.Parameter(torch.ones(hidden_size)) -> deterministic ones.
    weight = jnp.ones((hidden,), dtype=jnp.float32)

    out = t5_layernorm(x, weight, eps=1e-6)
    out = jax.block_until_ready(out)
    ref = _ref_t5_layernorm(x, weight, 1e-6)
    assert out.shape == x.shape
    assert out.dtype == ref.dtype
    assert jnp.allclose(out, ref, atol=1e-5, rtol=1e-5)

    # Ragged rows handled inside the grid (no wrapper pad/slice): rows=15.
    k2 = jax.random.PRNGKey(1)
    x2 = jax.random.normal(k2, (3, 5, 256), dtype=jnp.float32)
    w2 = jax.random.normal(jax.random.PRNGKey(2), (256,), dtype=jnp.float32)
    out2 = jax.block_until_ready(t5_layernorm(x2, w2, eps=1e-6))
    ref2 = _ref_t5_layernorm(x2, w2, 1e-6)
    assert jnp.allclose(out2, ref2, atol=1e-5, rtol=1e-5)

    # Multi-step grid with a ragged last block: rows=20, forced tile_rows=8.
    k3 = jax.random.PRNGKey(3)
    x3 = jax.random.normal(k3, (1, 20, 256), dtype=jnp.float32)
    out3 = jax.block_until_ready(t5_layernorm(x3, w2, eps=1e-6, tile_rows=8))
    ref3 = _ref_t5_layernorm(x3, w2, 1e-6)
    assert jnp.allclose(out3, ref3, atol=1e-5, rtol=1e-5)

    print("KERNEL_OK")
</pallas_src>

<mosaic_0001>
module attributes {stable_mosaic.version = 11 : i64} {
  func.func @_t5_layernorm_kernel(%arg0: i32, %arg1: memref<16x32xf32, #tpu.memory_space<vmem>>, %arg2: memref<1x32xf32, #tpu.memory_space<vmem>>, %arg3: memref<16x32xf32, #tpu.memory_space<vmem>>) attributes {dimension_semantics = [#tpu.dimension_semantics<parallel>], iteration_bounds = array<i64: 1>, scalar_prefetch = 0 : i64, scratch_operands = 0 : i64, tpu.core_type = #tpu.core_type<tc>, window_params = [{transform_indices = @transform_0, window_bounds = array<i64: 16, 32>}, {pipeline_mode = #tpu.pipeline_mode<synchronous>, transform_indices = @transform_1, window_bounds = array<i64: 1, 32>}, {transform_indices = @transform_2, window_bounds = array<i64: 16, 32>}]} {
    %c0 = arith.constant 0 : index
    %c0_0 = arith.constant 0 : index
    %0 = vector.load %arg1[%c0, %c0_0] : memref<16x32xf32, #tpu.memory_space<vmem>>, vector<16x32xf32>
    %1 = arith.mulf %0, %0 : vector<16x32xf32>
    %cst = arith.constant dense<0.000000e+00> : vector<16xf32>
    %2 = vector.multi_reduction <add>, %1, %cst [1] : vector<16x32xf32> to vector<16xf32>
    %3 = vector.shape_cast %2 : vector<16xf32> to vector<16x1xf32>
    %cst_1 = arith.constant 3.200000e+01 : f32
    %4 = vector.broadcast %cst_1 : f32 to vector<16x1xf32>
    %5 = arith.divf %3, %4 : vector<16x1xf32>
    %cst_2 = arith.constant 9.99999997E-7 : f32
    %6 = vector.broadcast %cst_2 : f32 to vector<16x1xf32>
    %7 = arith.addf %5, %6 : vector<16x1xf32>
    %8 = math.rsqrt %7 : vector<16x1xf32>
    %9 = vector.broadcast %8 : vector<16x1xf32> to vector<16x32xf32>
    %10 = arith.mulf %0, %9 : vector<16x32xf32>
    %c0_3 = arith.constant 0 : index
    %c0_4 = arith.constant 0 : index
    %11 = vector.load %arg2[%c0_3, %c0_4] : memref<1x32xf32, #tpu.memory_space<vmem>>, vector<1x32xf32>
    %12 = vector.broadcast %11 : vector<1x32xf32> to vector<16x32xf32>
    %13 = arith.mulf %12, %10 : vector<16x32xf32>
    %c0_5 = arith.constant 0 : index
    %c0_6 = arith.constant 0 : index
    %14 = vector.load %arg3[%c0_5, %c0_6] : memref<16x32xf32, #tpu.memory_space<vmem>>, vector<16x32xf32>
    tpu.vector_store %arg3[%c0_5, %c0_6], %13 {strides = array<i32>} : memref<16x32xf32, #tpu.memory_space<vmem>>, vector<16x32xf32>,
    return
  }
  func.func @transform_0(%arg0: i32) -> (i32, i32) {
    %c0_i32 = arith.constant 0 : i32
    %c0_i32_0 = arith.constant 0 : i32
    return %arg0, %c0_i32 : i32, i32
  }
  func.func @transform_1(%arg0: i32) -> (i32, i32) {
    %c0_i32 = arith.constant 0 : i32
    %c0_i32_0 = arith.constant 0 : i32
    %c0_i32_1 = arith.constant 0 : i32
    return %c0_i32, %c0_i32_0 : i32, i32
  }
  func.func @transform_2(%arg0: i32) -> (i32, i32) {
    %c0_i32 = arith.constant 0 : i32
    %c0_i32_0 = arith.constant 0 : i32
    return %arg0, %c0_i32 : i32, i32
  }
}

</mosaic_0001>

<llo_original>
// kernel: tpu_custom_call.1
$region0: #{tpu_custom_call.1}
  #allocation0 [shape = 'u32[]', space=smem, size = 0x4, offset = 0x4, fixed_abs, tag = 'smem constant byte address 0x4 - core index']
  #allocation1 [shape = 'u32[144,128]{1,0:T(1,128)}', space=vmem, size = 0x12000, scoped, tag = 'internal scratch']
  %s0 = inlined_call_operand.hbm [shape: f32[16,32], index: 0, kind: input, shape index: {}]
  %s1 = inlined_call_operand.vmem [shape: f32[1,32], index: 1, kind: input, shape index: {}]
  %s2 = inlined_call_operand.hbm [shape: f32[16,32], index: 2, kind: output, shape index: {}]
  %s3 = sld [smem:[#allocation0]]
  $region22: #{tpu_custom_call.1} parent=0
    _
  %s5 = ssub.s32 1, %s3
  %s6 = scalar_select 0, %s5, %s3
  $region1: #{tpu_custom_call.1} parent=0
    #allocation2 [shape = 'u8[8192]{0}', space=vmem, size = 0x2000, scoped, tag = 'input window, operand 0, single buffered']
    #allocation3 [shape = 's32[1]{0}', space=sflag, size = 0x4, scoped, tag = 'scoped memory for tpu_custom_call.1']
    #allocation4 [shape = 's32[1]{0}', space=sflag, size = 0x4, scoped, tag = 'scoped memory for tpu_custom_call.1']
    #allocation5 [shape = 'u8[8192]{0}', space=vmem, size = 0x2000, scoped, tag = 'output window, operand 0, single buffered']
    %7 = vsyncpa [#allocation3], 0
    %8 = vsyncpa [#allocation4], 0
    // Predicated region
    $region2: #{tpu_custom_call.1} parent=1 // pred_check
      _
    $region3: #{tpu_custom_call.1} parent=1 // pred_check_branch
      %10 = sbr.rel (0) target = $region5
    $region4: #{tpu_custom_call.1} parent=1 // pred_region
      %s12 = ssub.s32 256, 256
      %13 = vsyncadd [#allocation3], %s12
      %s14 = sshll.u32 [#allocation2], 4
      %s15 = int_to_ptr.vmem [resolvable:$true] %s14
      %20 = dma.hbm_to_vmem [thread:$0]  %s0, 256, %s15, [#allocation3], 128, 128, 8
    $region5: #{tpu_custom_call.1} parent=1 // pred_fallthru
      _
    // Predicated region
    $region6: #{tpu_custom_call.1} parent=1 // pred_check
      _
    $region7: #{tpu_custom_call.1} parent=1 // pred_check_branch
      %22 = sbr.rel (0) target = $region9
    $region8: #{tpu_custom_call.1} parent=1 // pred_region
      _
    $region9: #{tpu_custom_call.1} parent=1 // pred_fallthru
      _
    // Predicated region
    $region10: #{tpu_custom_call.1} parent=1 // pred_check
      _
    $region11: #{tpu_custom_call.1} parent=1 // pred_check_branch
      %24 = sbr.rel (0) target = $region13
    $region12: #{tpu_custom_call.1} parent=1 // pred_region
      %25 = dma.done [#allocation3], 256
    $region13: #{tpu_custom_call.1} parent=1 // pred_fallthru
      _
    %v26 = vld [vmem:[#allocation2] sm:$0xff]
    %v27 = vld [vmem:[#allocation2 + $0x8] sm:$0xff]
    %v28 = vmul.f32 %v26, %v26
    %v29 = vmul.f32 %v27, %v27
    %vm30 = vcmask 261120
    %v31 = vsel %vm30, %v28, 0.0
    %32 = vadd.xlane.f32.xlu0 %v31
    %v33 = vpop.xlane.xlu0 %32
    %v34 = vsel %vm30, %v29, 0.0
    %35 = vadd.xlane.f32.xlu0 %v34
    %v36 = vpop.xlane.xlu0 %35
    %v37 = vrcp.pop 32.0
    %v38 = vmul.f32 %v33, %v37
    %v39 = vmul.f32 %v36, %v37
    %v40 = vadd.f32 %v38, 1e-06
    %v41 = vadd.f32 %v39, 1e-06
    %v42 = vrsqrt.pop %v40
    %v43 = vrsqrt.pop %v41
    %v44 = vmul.f32 %v26, %v42
    %v45 = vmul.f32 %v27, %v43
    %v46 = vld [vmem:[%s1] sm:$0x1]
    %v48 = vlaneseq
    %v49 = vshrl.u32 %v48, 7
    %v50 = vsub.s32 0, %v49
    %v51 = vrot.slane %v46, %v50
    %v53 = vmul.f32 %v51, %v44
    %v54 = vmul.f32 %v51, %v45
    %55 = vst.msk [vmem:[#allocation5] sm:$0xff] %vm30, %v53
    %56 = vst.msk [vmem:[#allocation5 + $0x8] sm:$0xff] %vm30, %v54
    // Predicated region
    $region14: #{tpu_custom_call.1} parent=1 // pred_check
      _
    $region15: #{tpu_custom_call.1} parent=1 // pred_check_branch
      %58 = sbr.rel (0) target = $region17
    $region16: #{tpu_custom_call.1} parent=1 // pred_region
      %s60 = ssub.s32 256, 256
      %61 = vsyncadd [#allocation4], %s60
      %s62 = sshll.u32 [#allocation5], 4
      %s63 = int_to_ptr.vmem [resolvable:$true] %s62
      %68 = dma.vmem_to_hbm [thread:$0]  %s63, 256, %s2, [#allocation4], 128, 128, 8
    $region17: #{tpu_custom_call.1} parent=1 // pred_fallthru
      _
    // Predicated region
    $region18: #{tpu_custom_call.1} parent=1 // pred_check
      _
    $region19: #{tpu_custom_call.1} parent=1 // pred_check_branch
      %70 = sbr.rel (0) target = $region21
    $region20: #{tpu_custom_call.1} parent=1 // pred_region
      %71 = dma.done [#allocation4], 256
    $region21: #{tpu_custom_call.1} parent=1 // pred_fallthru
      _
    %72 = vsyncpa [#allocation3], 1
    %73 = vsyncpa [#allocation4], 1

</llo_original>
